<compile_context>
chip_gen: v6e
topology: v6e:2x2x1
jax: 0.10.0
libtpu: 0.0.40
codegen_flags: <defaults>
</compile_context>

<pallas_src>
import math

import jax
import jax.numpy as jnp
import numpy as np
from jax.experimental import pallas as pl
from jax.experimental.pallas import tpu as pltpu


def _round_up(n, m):
    return ((n + m - 1) // m) * m


def _batch_tiling(B):
    """Pad batch to a sublane/MXU-friendly size and pick the batch tile."""
    if B <= 128:
        Bp = _round_up(B, 8)
        return Bp, Bp                   # single batch tile
    Bp = _round_up(B, 128)
    return Bp, 128                      # 128-row MXU tiles


# ----------------------------------------------------------------------------
# Fused per-head classifier kernel.
#   grid = (num_heads, num_batch_tiles)
#   Head axis outer -> w1/w2 blocks (indexed only by head) are NOT re-DMA'd
#   across the inner batch steps.  Batch axis "parallel" for megacore.
# ----------------------------------------------------------------------------
def lpn_head_kernel(x_ref, w1_ref, b1_ref, w2_ref, b2_ref, logits_ref,
                    feats_ref):
    """One (head, batch-tile) step of LPN.

    x_ref     : (1, TM, D)   bf16  pooled head input (cls token / ring pool)
    w1_ref    : (1, D, Hbp)  bf16  first Linear, eval-mode BN folded in
    b1_ref    : (1, 1, Hbp)  f32
    w2_ref    : (1, Hbp, Cp) bf16  classifier Linear
    b2_ref    : (1, 1, Cp)   f32
    logits_ref: (1, TM, Cp)  f32   classification logits (lane-dense padded)
    feats_ref : (1, TM, Hbp) f32   bottleneck feature (lane-dense padded)
    """
    x = x_ref[0]                                                   # (TM, D)

    # Linear -> (folded) BatchNorm1d == one affine matmul; f32 accumulation.
    f = jnp.dot(x, w1_ref[0], preferred_element_type=jnp.float32) + b1_ref[0]
    feats_ref[0] = f

    # Classifier Linear (Dropout is identity in eval mode); bf16 operands,
    # f32 accumulation on the MXU.
    logits_ref[0] = (jnp.dot(f.astype(w2_ref.dtype), w2_ref[0],
                             preferred_element_type=jnp.float32) + b2_ref[0])


def lpn_fused_call(pooled, packed, TM):
    """Single pallas_call running all (block+1) heads over batch tiles."""
    w1s, b1s, w2s, b2s = (packed["w1s"], packed["b1s"],
                          packed["w2s"], packed["b2s"])
    Hh, Bp, D = pooled.shape
    Hbp = w1s.shape[2]
    Cp = w2s.shape[2]
    NB = Bp // TM

    # VMEM budget: 2-deep buffers for every block + headroom, capped for
    # v7x's 64 MiB physical VMEM.
    blocks = [
        ((1, TM, D), pooled.dtype),
        ((1, D, Hbp), w1s.dtype),
        ((1, 1, Hbp), b1s.dtype),
        ((1, Hbp, Cp), w2s.dtype),
        ((1, 1, Cp), b2s.dtype),
        ((1, TM, Cp), jnp.float32),
        ((1, TM, Hbp), jnp.float32),
    ]
    block_bytes = sum(int(np.prod(s)) * jnp.dtype(d).itemsize
                      for s, d in blocks)
    vmem_limit = int(min(max(2 * block_bytes + (2 << 20), 4 << 20), 64 << 20))

    flops = Hh * (2 * Bp * D * Hbp + 2 * Bp * Hbp * Cp)
    bytes_accessed = (pooled.size * pooled.dtype.itemsize
                      + w1s.size * w1s.dtype.itemsize
                      + b1s.size * b1s.dtype.itemsize
                      + w2s.size * w2s.dtype.itemsize
                      + b2s.size * b2s.dtype.itemsize
                      + Hh * Bp * Cp * 4 + Hh * Bp * Hbp * 4)

    logits, feats = pl.pallas_call(
        lpn_head_kernel,
        grid=(Hh, NB),
        in_specs=[
            pl.BlockSpec((1, TM, D), lambda h, b: (h, b, 0)),     # pooled
            pl.BlockSpec((1, D, Hbp), lambda h, b: (h, 0, 0)),    # w1 (BN folded)
            pl.BlockSpec((1, 1, Hbp), lambda h, b: (h, 0, 0)),    # b1
            pl.BlockSpec((1, Hbp, Cp), lambda h, b: (h, 0, 0)),   # w2
            pl.BlockSpec((1, 1, Cp), lambda h, b: (h, 0, 0)),     # b2
        ],
        out_specs=(
            pl.BlockSpec((1, TM, Cp), lambda h, b: (h, b, 0)),    # logits
            pl.BlockSpec((1, TM, Hbp), lambda h, b: (h, b, 0)),   # features
        ),
        out_shape=(
            jax.ShapeDtypeStruct((Hh, Bp, Cp), jnp.float32),
            jax.ShapeDtypeStruct((Hh, Bp, Hbp), jnp.float32),
        ),
        compiler_params=pltpu.CompilerParams(
            dimension_semantics=("arbitrary", "parallel"),
            vmem_limit_bytes=vmem_limit),
        cost_estimate=pl.CostEstimate(flops=int(flops), transcendentals=0,
                                      bytes_accessed=int(bytes_accessed)),
    )(pooled, w1s, b1s, w2s, b2s)
    return logits, feats


# ----------------------------------------------------------------------------
# Static ring-pool weight construction (mirrors get_part_pool, no_overlap=True)
# ----------------------------------------------------------------------------
def build_ring_weights(H, W, block):
    assert H >= 2 * block and W >= 2 * block, "interpolate branch not supported"
    c_h, c_w = H // 2, W // 2
    per_h = H // (2 * block)
    per_w = W // (2 * block)
    rows, prev = [], np.zeros((H, W), np.float32)
    for i in range(1, block + 1):
        if i < block:
            m = np.zeros((H, W), np.float32)
            m[c_h - i * per_h:c_h + i * per_h,
              c_w - i * per_w:c_w + i * per_w] = 1.0
            area = (2 * i * per_h) * (2 * i * per_w)
        else:
            m = np.ones((H, W), np.float32)     # last part = whole map
            area = H * W
        # no_overlap=True: subtract previously-pooled inner square, average
        # over the full crop area (AdaptiveAvgPool2d of the zero-padded crop).
        rows.append(((m - prev) / float(area)).reshape(-1))
        prev = m
    return np.stack(rows, axis=0)               # (block, H*W)


# ----------------------------------------------------------------------------
# Parameter init (synthetic ClassBlock weights) + packing for the fused kernel
# ----------------------------------------------------------------------------
def _glorot(key, shape):
    lim = math.sqrt(6.0 / (shape[0] + shape[1]))
    return jax.random.uniform(key, shape, jnp.float32, -lim, lim)


def init_head_raw(key, din, hb, c):
    ks = jax.random.split(key, 8)
    w1 = _glorot(ks[0], (din, hb))
    b1 = 0.01 * jax.random.normal(ks[1], (hb,), jnp.float32)
    gamma = 1.0 + 0.1 * jax.random.normal(ks[2], (hb,), jnp.float32)
    beta = 0.1 * jax.random.normal(ks[3], (hb,), jnp.float32)
    rmean = 0.1 * jax.random.normal(ks[4], (hb,), jnp.float32)
    rvar = 1.0 + 0.1 * jnp.abs(jax.random.normal(ks[5], (hb,), jnp.float32))
    w2 = _glorot(ks[6], (hb, c))
    b2 = 0.01 * jax.random.normal(ks[7], (c,), jnp.float32)
    eps = 1e-5
    scale = gamma / jnp.sqrt(rvar + eps)        # eval-mode BatchNorm1d fold
    shift = beta - rmean * scale
    return dict(w1=w1, b1=b1, scale=scale, shift=shift, w2=w2, b2=b2)


def pack_lpn_params(raw_heads, wpool, din, hb, c):
    """Stack per-head params, fold BN into Linear1 (in f32), pad lane-dense,
    then quantize weights to bf16 (AFTER the fold, per review)."""
    Hh = len(raw_heads)
    N = wpool.shape[1]
    T = N + 1
    hbp = _round_up(hb, 128)
    cp = _round_up(c, 128)

    w1s = np.zeros((Hh, din, hbp), np.float32)
    b1s = np.zeros((Hh, 1, hbp), np.float32)
    w2s = np.zeros((Hh, hbp, cp), np.float32)
    b2s = np.zeros((Hh, 1, cp), np.float32)
    wsel = np.zeros((Hh, T), np.float32)
    wsel[0, 0] = 1.0                            # head 0 picks the cls token
    wsel[1:, 1:] = wpool                        # part heads: ring-pool weights

    for h, p in enumerate(raw_heads):
        scale = np.asarray(p["scale"])
        shift = np.asarray(p["shift"])
        w1s[h, :, :hb] = np.asarray(p["w1"]) * scale[None, :]   # BN fold in f32
        b1s[h, 0, :hb] = np.asarray(p["b1"]) * scale + shift
        w2s[h, :hb, :c] = np.asarray(p["w2"])
        b2s[h, 0, :c] = np.asarray(p["b2"])

    return dict(wsel=jnp.asarray(wsel),
                w1s=jnp.asarray(w1s, dtype=jnp.bfloat16),
                b1s=jnp.asarray(b1s),
                w2s=jnp.asarray(w2s, dtype=jnp.bfloat16),
                b2s=jnp.asarray(b2s),
                hb=hb, c=c)


def init_lpn_params(key, in_planes, num_bottleneck, nclasses, block, S):
    keys = jax.random.split(key, block + 1)
    raw_heads = [init_head_raw(keys[i], in_planes, num_bottleneck, nclasses)
                 for i in range(block + 1)]      # [global, part_1, ..., part_block]
    wpool = build_ring_weights(S, S, block)
    packed = pack_lpn_params(raw_heads, wpool, in_planes, num_bottleneck,
                             nclasses)
    return packed, raw_heads, wpool


# ----------------------------------------------------------------------------
# LPN forward (eval mode)
# ----------------------------------------------------------------------------
def lpn_forward(features, packed, block, training=False):
    # features: (B, 1 + S*S, in_planes)
    B = features.shape[0]
    Bp, TM = _batch_tiling(B)
    feat = jnp.pad(features.astype(jnp.float32),
                   ((0, Bp - B), (0, 0), (0, 0)))

    # Hoisted pooling: cls-token select + ring-average pooling for ALL heads
    # as one MXU contraction over the token axis (per performance review).
    pooled = jnp.einsum('ht,btd->hbd', packed["wsel"], feat,
                        precision=jax.lax.Precision.HIGHEST)
    pooled = pooled.astype(jnp.bfloat16)                 # (Hh, Bp, D)

    logits_all, feats_all = lpn_fused_call(pooled, packed, TM)

    C, Hb = packed["c"], packed["hb"]
    total_cls = [logits_all[h, :B, :C] for h in range(block + 1)]
    feats = feats_all[:, :B, :Hb]                        # (block+1, B, Hb)
    if not training:
        total_features = jnp.transpose(feats, (1, 2, 0))  # (B, Hb, block+1)
    else:
        total_features = [feats[h] for h in range(block + 1)]
    return [total_cls, total_features]


# ----------------------------------------------------------------------------
# Pure-JAX reference (unfolded BN, f32, HIGHEST precision) for correctness
# ----------------------------------------------------------------------------
def lpn_reference(features, raw_heads, wpool, block):
    hi = jax.lax.Precision.HIGHEST
    cls_tok = features[:, 0]
    img = features[:, 1:]
    pooled = jnp.einsum('kn,bnd->bkd', jnp.asarray(wpool), img, precision=hi)

    def head(x, p):
        h = jnp.dot(x, p["w1"], precision=hi) + p["b1"][None, :]
        f = h * p["scale"][None, :] + p["shift"][None, :]
        return jnp.dot(f, p["w2"], precision=hi) + p["b2"][None, :], f

    cls_list, feat_list = [], []
    c0, f0 = head(cls_tok, raw_heads[0])
    cls_list.append(c0)
    feat_list.append(f0)
    for i in range(block):
        ci, fi = head(pooled[:, i], raw_heads[i + 1])
        cls_list.append(ci)
        feat_list.append(fi)
    return cls_list, jnp.stack(feat_list, axis=-1)


# ----------------------------------------------------------------------------
if __name__ == "__main__":
    B = 2              # batch
    in_planes = 32     # token dim
    S = 4              # 4x4 = 16 image tokens (+1 cls token)
    block = 2
    num_bottleneck = 32
    nclasses = 8

    key = jax.random.PRNGKey(0)
    k_feat, k_params = jax.random.split(key)
    features = jax.random.normal(k_feat, (B, 1 + S * S, in_planes), jnp.float32)
    packed, raw_heads, wpool = init_lpn_params(
        k_params, in_planes, num_bottleneck, nclasses, block, S)

    total_cls, total_features = lpn_forward(features, packed, block,
                                            training=False)
    jax.block_until_ready(total_cls)
    jax.block_until_ready(total_features)

    # Shape checks (mirror the PyTorch module's eval-mode outputs).
    assert len(total_cls) == block + 1
    assert all(c.shape == (B, nclasses) for c in total_cls)
    assert total_features.shape == (B, num_bottleneck, block + 1)

    # Numerical check against a pure-JAX f32 reference (tolerance loosened for
    # the bf16 weight/input quantization in the kernel path).
    ref_cls, ref_feats = lpn_reference(features, raw_heads, wpool, block)
    for got, want in zip(total_cls, ref_cls):
        np.testing.assert_allclose(np.asarray(got), np.asarray(want),
                                   rtol=2e-2, atol=2e-2)
    np.testing.assert_allclose(np.asarray(total_features),
                               np.asarray(ref_feats), rtol=2e-2, atol=2e-2)

    print("KERNEL_OK")
</pallas_src>

<mosaic_0001>
module attributes {stable_mosaic.version = 11 : i64} {
  func.func @lpn_head_kernel(%arg0: i32, %arg1: i32, %arg2: memref<1x8x32xbf16, #tpu.memory_space<vmem>>, %arg3: memref<1x32x128xbf16, #tpu.memory_space<vmem>>, %arg4: memref<1x1x128xf32, #tpu.memory_space<vmem>>, %arg5: memref<1x128x128xbf16, #tpu.memory_space<vmem>>, %arg6: memref<1x1x128xf32, #tpu.memory_space<vmem>>, %arg7: memref<1x8x128xf32, #tpu.memory_space<vmem>>, %arg8: memref<1x8x128xf32, #tpu.memory_space<vmem>>) attributes {dimension_semantics = [#tpu.dimension_semantics<arbitrary>, #tpu.dimension_semantics<parallel>], iteration_bounds = array<i64: 3, 1>, scalar_prefetch = 0 : i64, scratch_operands = 0 : i64, tpu.core_type = #tpu.core_type<tc>, window_params = [{transform_indices = @transform_0, window_bounds = array<i64: 1, 8, 32>}, {transform_indices = @transform_1, window_bounds = array<i64: 1, 32, 128>}, {transform_indices = @transform_2, window_bounds = array<i64: 1, 1, 128>}, {transform_indices = @transform_3, window_bounds = array<i64: 1, 128, 128>}, {transform_indices = @transform_4, window_bounds = array<i64: 1, 1, 128>}, {transform_indices = @transform_5, window_bounds = array<i64: 1, 8, 128>}, {transform_indices = @transform_6, window_bounds = array<i64: 1, 8, 128>}]} {
    %c0 = arith.constant 0 : index
    %c0_0 = arith.constant 0 : index
    %c0_1 = arith.constant 0 : index
    %0 = vector.load %arg2[%c0, %c0_0, %c0_1] : memref<1x8x32xbf16, #tpu.memory_space<vmem>>, vector<1x8x32xbf16>
    %1 = vector.shape_cast %0 : vector<1x8x32xbf16> to vector<8x32xbf16>
    %c0_2 = arith.constant 0 : index
    %c0_3 = arith.constant 0 : index
    %c0_4 = arith.constant 0 : index
    %2 = vector.load %arg3[%c0_2, %c0_3, %c0_4] : memref<1x32x128xbf16, #tpu.memory_space<vmem>>, vector<1x32x128xbf16>
    %3 = vector.shape_cast %2 : vector<1x32x128xbf16> to vector<32x128xbf16>
    %cst = arith.constant dense<0.000000e+00> : vector<8x128xf32>
    %4 = tpu.matmul %1, %3, %cst {dimension_numbers = #tpu.dot_dimension_numbers<[1], [0], [0], [1], [0, 0, 1, 1], [], []>} : vector<8x32xbf16>, vector<32x128xbf16>, vector<8x128xf32> -> vector<8x128xf32>
    %c0_5 = arith.constant 0 : index
    %c0_6 = arith.constant 0 : index
    %c0_7 = arith.constant 0 : index
    %5 = vector.load %arg4[%c0_5, %c0_6, %c0_7] : memref<1x1x128xf32, #tpu.memory_space<vmem>>, vector<1x1x128xf32>
    %6 = vector.shape_cast %5 : vector<1x1x128xf32> to vector<1x128xf32>
    %7 = vector.broadcast %6 : vector<1x128xf32> to vector<8x128xf32>
    %8 = arith.addf %4, %7 : vector<8x128xf32>
    %c0_8 = arith.constant 0 : index
    %c0_9 = arith.constant 0 : index
    %c0_10 = arith.constant 0 : index
    %9 = vector.load %arg8[%c0_8, %c0_9, %c0_10] : memref<1x8x128xf32, #tpu.memory_space<vmem>>, vector<1x8x128xf32>
    %10 = vector.shape_cast %9 : vector<1x8x128xf32> to vector<8x128xf32>
    %11 = vector.shape_cast %8 : vector<8x128xf32> to vector<1x8x128xf32>
    tpu.vector_store %arg8[%c0_8, %c0_9, %c0_10], %11 {strides = array<i32>} : memref<1x8x128xf32, #tpu.memory_space<vmem>>, vector<1x8x128xf32>,
    %12 = arith.truncf %8 : vector<8x128xf32> to vector<8x128xbf16>
    %c0_11 = arith.constant 0 : index
    %c0_12 = arith.constant 0 : index
    %c0_13 = arith.constant 0 : index
    %13 = vector.load %arg5[%c0_11, %c0_12, %c0_13] : memref<1x128x128xbf16, #tpu.memory_space<vmem>>, vector<1x128x128xbf16>
    %14 = vector.shape_cast %13 : vector<1x128x128xbf16> to vector<128x128xbf16>
    %cst_14 = arith.constant dense<0.000000e+00> : vector<8x128xf32>
    %15 = tpu.matmul %12, %14, %cst_14 {dimension_numbers = #tpu.dot_dimension_numbers<[1], [0], [0], [1], [0, 0, 1, 1], [], []>} : vector<8x128xbf16>, vector<128x128xbf16>, vector<8x128xf32> -> vector<8x128xf32>
    %c0_15 = arith.constant 0 : index
    %c0_16 = arith.constant 0 : index
    %c0_17 = arith.constant 0 : index
    %16 = vector.load %arg6[%c0_15, %c0_16, %c0_17] : memref<1x1x128xf32, #tpu.memory_space<vmem>>, vector<1x1x128xf32>
    %17 = vector.shape_cast %16 : vector<1x1x128xf32> to vector<1x128xf32>
    %18 = vector.broadcast %17 : vector<1x128xf32> to vector<8x128xf32>
    %19 = arith.addf %15, %18 : vector<8x128xf32>
    %c0_18 = arith.constant 0 : index
    %c0_19 = arith.constant 0 : index
    %c0_20 = arith.constant 0 : index
    %20 = vector.load %arg7[%c0_18, %c0_19, %c0_20] : memref<1x8x128xf32, #tpu.memory_space<vmem>>, vector<1x8x128xf32>
    %21 = vector.shape_cast %20 : vector<1x8x128xf32> to vector<8x128xf32>
    %22 = vector.shape_cast %19 : vector<8x128xf32> to vector<1x8x128xf32>
    tpu.vector_store %arg7[%c0_18, %c0_19, %c0_20], %22 {strides = array<i32>} : memref<1x8x128xf32, #tpu.memory_space<vmem>>, vector<1x8x128xf32>,
    return
  }
  func.func @transform_0(%arg0: i32, %arg1: i32) -> (i32, i32, i32) {
    %c0_i32 = arith.constant 0 : i32
    %c0_i32_0 = arith.constant 0 : i32
    return %arg0, %arg1, %c0_i32 : i32, i32, i32
  }
  func.func @transform_1(%arg0: i32, %arg1: i32) -> (i32, i32, i32) {
    %c0_i32 = arith.constant 0 : i32
    %c0_i32_0 = arith.constant 0 : i32
    %c0_i32_1 = arith.constant 0 : i32
    return %arg0, %c0_i32, %c0_i32_0 : i32, i32, i32
  }
  func.func @transform_2(%arg0: i32, %arg1: i32) -> (i32, i32, i32) {
    %c0_i32 = arith.constant 0 : i32
    %c0_i32_0 = arith.constant 0 : i32
    %c0_i32_1 = arith.constant 0 : i32
    return %arg0, %c0_i32, %c0_i32_0 : i32, i32, i32
  }
  func.func @transform_3(%arg0: i32, %arg1: i32) -> (i32, i32, i32) {
    %c0_i32 = arith.constant 0 : i32
    %c0_i32_0 = arith.constant 0 : i32
    %c0_i32_1 = arith.constant 0 : i32
    return %arg0, %c0_i32, %c0_i32_0 : i32, i32, i32
  }
  func.func @transform_4(%arg0: i32, %arg1: i32) -> (i32, i32, i32) {
    %c0_i32 = arith.constant 0 : i32
    %c0_i32_0 = arith.constant 0 : i32
    %c0_i32_1 = arith.constant 0 : i32
    return %arg0, %c0_i32, %c0_i32_0 : i32, i32, i32
  }
  func.func @transform_5(%arg0: i32, %arg1: i32) -> (i32, i32, i32) {
    %c0_i32 = arith.constant 0 : i32
    %c0_i32_0 = arith.constant 0 : i32
    return %arg0, %arg1, %c0_i32 : i32, i32, i32
  }
  func.func @transform_6(%arg0: i32, %arg1: i32) -> (i32, i32, i32) {
    %c0_i32 = arith.constant 0 : i32
    %c0_i32_0 = arith.constant 0 : i32
    return %arg0, %arg1, %c0_i32 : i32, i32, i32
  }
}

</mosaic_0001>

<llo_original>
// kernel: tpu_custom_call.1
$region0: #{tpu_custom_call.1}
  #allocation0 [shape = 'u32[]', space=smem, size = 0x4, offset = 0x4, fixed_abs, tag = 'smem constant byte address 0x4 - core index']
  #allocation1 [shape = 'u32[144,128]{1,0:T(1,128)}', space=vmem, size = 0x12000, scoped, tag = 'internal scratch']
  %s0 = inlined_call_operand.hbm [shape: bf16[3,8,32], index: 0, kind: input, shape index: {}]
  %s1 = inlined_call_operand.hbm [shape: bf16[3,32,128], index: 1, kind: input, shape index: {}]
  %s2 = inlined_call_operand.vmem [shape: f32[3,1,128], index: 2, kind: input, shape index: {}]
  %s3 = inlined_call_operand.hbm [shape: bf16[3,128,128], index: 3, kind: input, shape index: {}]
  %s4 = inlined_call_operand.vmem [shape: f32[3,1,128], index: 4, kind: input, shape index: {}]
  %s5 = inlined_call_operand.hbm [shape: f32[3,8,128], index: 5, kind: output, shape index: {0}]
  %s6 = inlined_call_operand.hbm [shape: f32[3,8,128], index: 6, kind: output, shape index: {1}]
  %7 = xla_tuple %s5, %s6
  %s8 = sld [smem:[#allocation0]]
  $region73: #{tpu_custom_call.1} parent=0
    _
  %s10 = ssub.s32 1, %s8
  %s11 = scalar_select 0, %s10, %s8
  $region1: #{tpu_custom_call.1} parent=0
    #allocation2 [shape = 'u8[4096]{0}', space=vmem, size = 0x1000, scoped, tag = 'input window, operand 0']
    #allocation3 [shape = 's32[2]{0}', space=sflag, size = 0x8, scoped, tag = 'scoped memory for tpu_custom_call.1']
    #allocation4 [shape = 's32[2]{0}', space=sflag, size = 0x8, scoped, tag = 'scoped memory for tpu_custom_call.1']
    #allocation5 [shape = 'u8[16384]{0}', space=vmem, size = 0x4000, scoped, tag = 'input window, operand 1']
    #allocation6 [shape = 's32[2]{0}', space=sflag, size = 0x8, scoped, tag = 'scoped memory for tpu_custom_call.1']
    #allocation7 [shape = 'u8[65536]{0}', space=vmem, size = 0x10000, scoped, tag = 'input window, operand 3']
    #allocation8 [shape = 'u8[8192]{0}', space=vmem, size = 0x2000, scoped, tag = 'output window, operand 0']
    #allocation9 [shape = 'u8[8192]{0}', space=vmem, size = 0x2000, scoped, tag = 'output window, operand 1']
    #allocation10 [shape = 's32[2]{0}', space=sflag, size = 0x8, scoped, tag = 'scoped memory for tpu_custom_call.1']
    %12 = vsyncpa [#allocation3], 0
    %s13 = scalar_lea.sflag [#allocation3], 1
    %14 = vsyncpa %s13, 0
    %15 = vsyncpa [#allocation6], 0
    %s16 = scalar_lea.sflag [#allocation6], 1
    %17 = vsyncpa %s16, 0
    %18 = vsyncpa [#allocation4], 0
    %s19 = scalar_lea.sflag [#allocation4], 1
    %20 = vsyncpa %s19, 0
    %21 = vsyncpa [#allocation10], 0
    %s22 = scalar_lea.sflag [#allocation10], 1
    %23 = vsyncpa %s22, 0
    loop: start=0, step=1, limit=5
    $region2: #{tpu_custom_call.1} parent=1 // loop_pre_header
      _
    $region3: #{tpu_custom_call.1} parent=1 // loop_header
      %s25 = sphi 0, %s29
      %p26 = scmp.ge.s32.totalorder %s25, 5
      %s32 = sphi 0, %s44
      %s33 = sphi 0, %s40
      %s34 = sphi 0, %s32
      %s35 = sphi 0, %s33
      %s36 = sphi 0, %s34
      %s37 = sphi 0, %s35
      %s49 = sphi 0, %s51
      %s52 = sphi 0, %s49
      %s53 = sphi 0, %s52
      %s69 = sphi 0, %s53
      %s75 = sphi 0, %s77
      %s78 = sphi 0, %s75
      %s79 = sphi 0, %s78
      %s95 = sphi 0, %s79
      %s101 = sphi 0, %s103
      %s104 = sphi 0, %s101
      %s105 = sphi 0, %s104
      %s121 = sphi 0, %s105
      %s127 = sphi 0, %s129
      %s130 = sphi 0, %s127
      %s131 = sphi 0, %s130
      %s147 = sphi 0, %s131
      %s153 = sphi 0, %s155
      %s156 = sphi 0, %s153
      %s157 = sphi 0, %s156
      %s173 = sphi 0, %s157
      %s181 = sphi 0, %s183
      %s184 = sphi 0, %s181
      %s185 = sphi 0, %s184
      %s201 = sphi 0, %s185
      %s209 = sphi 0, %s211
      %s212 = sphi 0, %s209
      %s213 = sphi 0, %s212
      %s229 = sphi 0, %s213
    $region4: #{tpu_custom_call.1} parent=1 // loop_header_branch
      %28 = sbr.rel (%p26) target = $region8
    $region5: #{tpu_custom_call.1} parent=1 // loop_body
      %s30 = ssub.s32 %s25, 1
      %s31 = ssub.s32 %s25, 2
      %s38 = sadd.s32 1, %s33
      %p39 = scmp.ge.s32.totalorder %s38, 1
      %s40 = scalar_select %p39, 0, %s38
      %s41 = sadd.s32 1, %s32
      %s42 = scalar_select %p39, %s41, %s32
      %p43 = scmp.ge.s32.totalorder %s42, 3
      %s44 = scalar_select %p43, 0, %s42
      %s45 = ssub.s32 %s32, %s44
      %s46 = ssub.s32 %s33, %s40
      %s47 = sor.u32 %s45, %s46
      %p48 = scmp.eq.s32.totalorder %s47, 0
      %s50 = sadd.s32 %s49, 1
      %s51 = scalar_select %p48, %s49, %s50
      %p54 = pneg %p48
      %p55 = scmp.eq.s32.totalorder %s25, 2
      %p56 = por %p54, %p55
      %p57 = scmp.ne.s32.totalorder %s49, %s52
      %p58 = scmp.eq.s32.totalorder %s25, 0
      %p59 = por %p57, %p58
      %p60 = scmp.ne.s32.totalorder %s49, %s52
      %p61 = scmp.eq.s32.totalorder %s30, 2
      %p62 = por %p60, %p61
      %p63 = scmp.ne.s32.totalorder %s52, %s53
      %p64 = scmp.eq.s32.totalorder %s30, 0
      %p65 = por %p63, %p64
      %p66 = scmp.ne.s32.totalorder %s52, %s53
      %p67 = scmp.eq.s32.totalorder %s31, 2
      %p68 = por %p66, %p67
      %p70 = scmp.ne.s32.totalorder %s53, %s69
      %p71 = scmp.eq.s32.totalorder %s31, 0
      %p72 = por %p70, %p71
      %s73 = ssub.s32 %s32, %s44
      %p74 = scmp.eq.s32.totalorder %s73, 0
      %s76 = sadd.s32 %s75, 1
      %s77 = scalar_select %p74, %s75, %s76
      %p80 = pneg %p74
      %p81 = scmp.eq.s32.totalorder %s25, 2
      %p82 = por %p80, %p81
      %p83 = scmp.ne.s32.totalorder %s75, %s78
      %p84 = scmp.eq.s32.totalorder %s25, 0
      %p85 = por %p83, %p84
      %p86 = scmp.ne.s32.totalorder %s75, %s78
      %p87 = scmp.eq.s32.totalorder %s30, 2
      %p88 = por %p86, %p87
      %p89 = scmp.ne.s32.totalorder %s78, %s79
      %p90 = scmp.eq.s32.totalorder %s30, 0
      %p91 = por %p89, %p90
      %p92 = scmp.ne.s32.totalorder %s78, %s79
      %p93 = scmp.eq.s32.totalorder %s31, 2
      %p94 = por %p92, %p93
      %p96 = scmp.ne.s32.totalorder %s79, %s95
      %p97 = scmp.eq.s32.totalorder %s31, 0
      %p98 = por %p96, %p97
      %s99 = ssub.s32 %s32, %s44
      %p100 = scmp.eq.s32.totalorder %s99, 0
      %s102 = sadd.s32 %s101, 1
      %s103 = scalar_select %p100, %s101, %s102
      %p106 = pneg %p100
      %p107 = scmp.eq.s32.totalorder %s25, 2
      %p108 = por %p106, %p107
      %p109 = scmp.ne.s32.totalorder %s101, %s104
      %p110 = scmp.eq.s32.totalorder %s25, 0
      %p111 = por %p109, %p110
      %p112 = scmp.ne.s32.totalorder %s101, %s104
      %p113 = scmp.eq.s32.totalorder %s30, 2
      %p114 = por %p112, %p113
      %p115 = scmp.ne.s32.totalorder %s104, %s105
      %p116 = scmp.eq.s32.totalorder %s30, 0
      %p117 = por %p115, %p116
      %p118 = scmp.ne.s32.totalorder %s104, %s105
      %p119 = scmp.eq.s32.totalorder %s31, 2
      %p120 = por %p118, %p119
      %p122 = scmp.ne.s32.totalorder %s105, %s121
      %p123 = scmp.eq.s32.totalorder %s31, 0
      %p124 = por %p122, %p123
      %s125 = ssub.s32 %s32, %s44
      %p126 = scmp.eq.s32.totalorder %s125, 0
      %s128 = sadd.s32 %s127, 1
      %s129 = scalar_select %p126, %s127, %s128
      %p132 = pneg %p126
      %p133 = scmp.eq.s32.totalorder %s25, 2
      %p134 = por %p132, %p133
      %p135 = scmp.ne.s32.totalorder %s127, %s130
      %p136 = scmp.eq.s32.totalorder %s25, 0
      %p137 = por %p135, %p136
      %p138 = scmp.ne.s32.totalorder %s127, %s130
      %p139 = scmp.eq.s32.totalorder %s30, 2
      %p140 = por %p138, %p139
      %p141 = scmp.ne.s32.totalorder %s130, %s131
      %p142 = scmp.eq.s32.totalorder %s30, 0
      %p143 = por %p141, %p142
      %p144 = scmp.ne.s32.totalorder %s130, %s131
      %p145 = scmp.eq.s32.totalorder %s31, 2
      %p146 = por %p144, %p145
      %p148 = scmp.ne.s32.totalorder %s131, %s147
      %p149 = scmp.eq.s32.totalorder %s31, 0
      %p150 = por %p148, %p149
      %s151 = ssub.s32 %s32, %s44
      %p152 = scmp.eq.s32.totalorder %s151, 0
      %s154 = sadd.s32 %s153, 1
      %s155 = scalar_select %p152, %s153, %s154
      %p158 = pneg %p152
      %p159 = scmp.eq.s32.totalorder %s25, 2
      %p160 = por %p158, %p159
      %p161 = scmp.ne.s32.totalorder %s153, %s156
      %p162 = scmp.eq.s32.totalorder %s25, 0
      %p163 = por %p161, %p162
      %p164 = scmp.ne.s32.totalorder %s153, %s156
      %p165 = scmp.eq.s32.totalorder %s30, 2
      %p166 = por %p164, %p165
      %p167 = scmp.ne.s32.totalorder %s156, %s157
      %p168 = scmp.eq.s32.totalorder %s30, 0
      %p169 = por %p167, %p168
      %p170 = scmp.ne.s32.totalorder %s156, %s157
      %p171 = scmp.eq.s32.totalorder %s31, 2
      %p172 = por %p170, %p171
      %p174 = scmp.ne.s32.totalorder %s157, %s173
      %p175 = scmp.eq.s32.totalorder %s31, 0
      %p176 = por %p174, %p175
      %s177 = ssub.s32 %s32, %s44
      %s178 = ssub.s32 %s33, %s40
      %s179 = sor.u32 %s177, %s178
      %p180 = scmp.eq.s32.totalorder %s179, 0
      %s182 = sadd.s32 %s181, 1
      %s183 = scalar_select %p180, %s181, %s182
      %p186 = pneg %p180
      %p187 = scmp.eq.s32.totalorder %s25, 2
      %p188 = por %p186, %p187
      %p189 = scmp.ne.s32.totalorder %s181, %s184
      %p190 = scmp.eq.s32.totalorder %s25, 0
      %p191 = por %p189, %p190
      %p192 = scmp.ne.s32.totalorder %s181, %s184
      %p193 = scmp.eq.s32.totalorder %s30, 2
      %p194 = por %p192, %p193
      %p195 = scmp.ne.s32.totalorder %s184, %s185
      %p196 = scmp.eq.s32.totalorder %s30, 0
      %p197 = por %p195, %p196
      %p198 = scmp.ne.s32.totalorder %s184, %s185
      %p199 = scmp.eq.s32.totalorder %s31, 2
      %p200 = por %p198, %p199
      %p202 = scmp.ne.s32.totalorder %s185, %s201
      %p203 = scmp.eq.s32.totalorder %s31, 0
      %p204 = por %p202, %p203
      %s205 = ssub.s32 %s32, %s44
      %s206 = ssub.s32 %s33, %s40
      %s207 = sor.u32 %s205, %s206
      %p208 = scmp.eq.s32.totalorder %s207, 0
      %s210 = sadd.s32 %s209, 1
      %s211 = scalar_select %p208, %s209, %s210
      %p214 = pneg %p208
      %p215 = scmp.eq.s32.totalorder %s25, 2
      %p216 = por %p214, %p215
      %p217 = scmp.ne.s32.totalorder %s209, %s212
      %p218 = scmp.eq.s32.totalorder %s25, 0
      %p219 = por %p217, %p218
      %p220 = scmp.ne.s32.totalorder %s209, %s212
      %p221 = scmp.eq.s32.totalorder %s30, 2
      %p222 = por %p220, %p221
      %p223 = scmp.ne.s32.totalorder %s212, %s213
      %p224 = scmp.eq.s32.totalorder %s30, 0
      %p225 = por %p223, %p224
      %p226 = scmp.ne.s32.totalorder %s212, %s213
      %p227 = scmp.eq.s32.totalorder %s31, 2
      %p228 = por %p226, %p227
      %p230 = scmp.ne.s32.totalorder %s213, %s229
      %p231 = scmp.eq.s32.totalorder %s31, 0
      %p232 = por %p230, %p231
      %p233 = scmp.le.s32.totalorder 1, %s25
      %p234 = scmp.lt.s32.totalorder %s25, 4
      %p235 = pnand %p233, %p234
      %p236 = pneg %p235
      // Predicated region
      $region9: #{tpu_custom_call.1} parent=5 // pred_check
        _
      $region10: #{tpu_custom_call.1} parent=5 // pred_check_branch
        %238 = sbr.rel (%p235) target = $region12
      $region11: #{tpu_custom_call.1} parent=5 // pred_region
        %s239 = ssub.s32 %s25, 1
      $region12: #{tpu_custom_call.1} parent=5 // pred_fallthru
        _
      %p240 = scmp.lt.s32.totalorder %s25, 3
      // Predicated region
      $region13: #{tpu_custom_call.1} parent=5 // pred_check
        %p241 = pneg %p240
      $region14: #{tpu_custom_call.1} parent=5 // pred_check_branch
        %243 = sbr.rel (%p241) target = $region16
      $region15: #{tpu_custom_call.1} parent=5 // pred_region
        // Predicated region
        $region17: #{tpu_custom_call.1} parent=15 // pred_check
          %p244 = pneg %p59
        $region18: #{tpu_custom_call.1} parent=15 // pred_check_branch
          %246 = sbr.rel (%p244) target = $region20
        $region19: #{tpu_custom_call.1} parent=15 // pred_region
          %s247 = sand.u32 %s49, 1
          %s248 = scalar_lea.sflag [#allocation3], %s247
          %s249 = sand.u32 %s49, 1
          %s250 = smul.addr %s249, 4
          %s251 = scalar_lea.vmem [#allocation2], %s250
          %s253 = ssub.s32 64, 64
          %254 = vsyncadd %s248, %s253
          %s255 = sadd.s32 %s33, %s32
          %s256 = smul.addr %s255, 64
          %s257 = scalar_lea.hbm %s0, %s256
          %s259 = sshll.u32 %s251, 4
          %s260 = int_to_ptr.vmem [resolvable:$true] %s259
          %262 = dma.hbm_to_vmem [thread:$0]  %s257, 64, %s260, %s248
        $region20: #{tpu_custom_call.1} parent=15 // pred_fallthru
          _
        // Predicated region
        $region21: #{tpu_custom_call.1} parent=15 // pred_check
          %p263 = pneg %p85
        $region22: #{tpu_custom_call.1} parent=15 // pred_check_branch
          %265 = sbr.rel (%p263) target = $region24
        $region23: #{tpu_custom_call.1} parent=15 // pred_region
          %s266 = sand.u32 %s25, 1
          %s267 = scalar_lea.sflag [#allocation6], %s266
          %s268 = sand.u32 %s75, 1
          %s269 = smul.addr %s268, 16
          %s270 = scalar_lea.vmem [#allocation5], %s269
          %s272 = ssub.s32 256, 256
          %273 = vsyncadd %s267, %s272
          %s274 = smul.addr %s32, 4
          %s275 = smul.addr %s274, 64
          %s276 = scalar_lea.hbm %s1, %s275
          %s277 = sshll.u32 %s270, 4
          %s278 = int_to_ptr.vmem [resolvable:$true] %s277
          %283 = dma.hbm_to_vmem [thread:$0]  %s276, 256, %s278, %s267, 64, 64, 4
        $region24: #{tpu_custom_call.1} parent=15 // pred_fallthru
          _
        // Predicated region
        $region25: #{tpu_custom_call.1} parent=15 // pred_check
          %p284 = pneg %p111
        $region26: #{tpu_custom_call.1} parent=15 // pred_check_branch
          %286 = sbr.rel (%p284) target = $region28
        $region27: #{tpu_custom_call.1} parent=15 // pred_region
          %p287 = scmp.lt.s32.totalorder %s32, 2
          %s288 = scalar_select %p287, %s32, 2
          %s289 = scalar_lea.vmem %s2, %s288
        $region28: #{tpu_custom_call.1} parent=15 // pred_fallthru
          _
        // Predicated region
        $region29: #{tpu_custom_call.1} parent=15 // pred_check
          %p290 = pneg %p137
        $region30: #{tpu_custom_call.1} parent=15 // pred_check_branch
          %292 = sbr.rel (%p290) target = $region32
        $region31: #{tpu_custom_call.1} parent=15 // pred_region
          %s293 = sand.u32 %s25, 1
          %s294 = scalar_lea.sflag [#allocation6], %s293
          %s295 = sand.u32 %s127, 1
          %s296 = smul.addr %s295, 64
          %s297 = scalar_lea.vmem [#allocation7], %s296
          %s299 = ssub.s32 1024, 1024
          %300 = vsyncadd %s294, %s299
          %s301 = smul.addr %s32, 16
          %s302 = smul.addr %s301, 64
          %s303 = scalar_lea.hbm %s3, %s302
          %s304 = sshll.u32 %s297, 4
          %s305 = int_to_ptr.vmem [resolvable:$true] %s304
          %310 = dma.hbm_to_vmem [thread:$0]  %s303, 1024, %s305, %s294, 64, 64, 4
        $region32: #{tpu_custom_call.1} parent=15 // pred_fallthru
          _
        // Predicated region
        $region33: #{tpu_custom_call.1} parent=15 // pred_check
          %p311 = pneg %p163
        $region34: #{tpu_custom_call.1} parent=15 // pred_check_branch
          %313 = sbr.rel (%p311) target = $region36
        $region35: #{tpu_custom_call.1} parent=15 // pred_region
          %p314 = scmp.lt.s32.totalorder %s32, 2
          %s315 = scalar_select %p314, %s32, 2
          %s316 = scalar_lea.vmem %s4, %s315
        $region36: #{tpu_custom_call.1} parent=15 // pred_fallthru
          _
      $region16: #{tpu_custom_call.1} parent=5 // pred_fallthru
        _
      %p317 = scmp.le.s32.totalorder 1, %s25
      %p318 = scmp.lt.s32.totalorder %s25, 4
      %p319 = pnand %p317, %p318
      %p320 = pneg %p319
      // Predicated region
      $region37: #{tpu_custom_call.1} parent=5 // pred_check
        _
      $region38: #{tpu_custom_call.1} parent=5 // pred_check_branch
        %322 = sbr.rel (%p319) target = $region40
      $region39: #{tpu_custom_call.1} parent=5 // pred_region
        %s323 = ssub.s32 %s25, 1
        %s324 = sand.u32 %s52, 1
        %s325 = scalar_lea.sflag [#allocation3], %s324
        %s326 = sand.u32 %s52, 1
        %s327 = smul.addr %s326, 4
        %s328 = scalar_lea.vmem [#allocation2], %s327
        // Predicated region
        $region41: #{tpu_custom_call.1} parent=39 // pred_check
          %p329 = pneg %p65
        $region42: #{tpu_custom_call.1} parent=39 // pred_check_branch
          %331 = sbr.rel (%p329) target = $region44
        $region43: #{tpu_custom_call.1} parent=39 // pred_region
          %332 = dma.done %s325, 64
        $region44: #{tpu_custom_call.1} parent=39 // pred_fallthru
          _
        %s333 = sand.u32 %s30, 1
        %s334 = scalar_lea.sflag [#allocation6], %s333
        %s335 = sand.u32 %s78, 1
        %s336 = smul.addr %s335, 16
        %s337 = scalar_lea.vmem [#allocation5], %s336
        // Predicated region
        $region45: #{tpu_custom_call.1} parent=39 // pred_check
          %p338 = pneg %p91
        $region46: #{tpu_custom_call.1} parent=39 // pred_check_branch
          %340 = sbr.rel (%p338) target = $region48
        $region47: #{tpu_custom_call.1} parent=39 // pred_region
          %341 = dma.done %s334, 256
        $region48: #{tpu_custom_call.1} parent=39 // pred_fallthru
          _
        %s342 = sand.u32 %s30, 1
        %s343 = scalar_lea.sflag [#allocation6], %s342
        %s344 = sand.u32 %s130, 1
        %s345 = smul.addr %s344, 64
        %s346 = scalar_lea.vmem [#allocation7], %s345
        // Predicated region
        $region49: #{tpu_custom_call.1} parent=39 // pred_check
          %p347 = pneg %p143
        $region50: #{tpu_custom_call.1} parent=39 // pred_check_branch
          %349 = sbr.rel (%p347) target = $region52
        $region51: #{tpu_custom_call.1} parent=39 // pred_region
          %350 = dma.done %s343, 1024
        $region52: #{tpu_custom_call.1} parent=39 // pred_fallthru
          _
        %s351 = sand.u32 %s52, 1
        %s352 = scalar_lea.sflag [#allocation3], %s351
        %s353 = sand.u32 %s52, 1
        %s354 = smul.addr %s353, 4
        %s355 = scalar_lea.vmem [#allocation2], %s354
        %p356 = pneg %p65
        %p357 = pneg %p62
        %s358 = sand.u32 %s30, 1
        %s359 = scalar_lea.sflag [#allocation6], %s358
        %s360 = sand.u32 %s78, 1
        %s361 = smul.addr %s360, 16
        %s362 = scalar_lea.vmem [#allocation5], %s361
        %p363 = pneg %p91
        %p364 = pneg %p88
        %p365 = scmp.lt.s32.totalorder %s34, 2
        %s366 = scalar_select %p365, %s34, 2
        %s367 = scalar_lea.vmem %s2, %s366
        %p368 = pneg %p117
        %p369 = pneg %p114
        %s370 = sand.u32 %s30, 1
        %s371 = scalar_lea.sflag [#allocation6], %s370
        %s372 = sand.u32 %s130, 1
        %s373 = smul.addr %s372, 64
        %s374 = scalar_lea.vmem [#allocation7], %s373
        %p375 = pneg %p143
        %p376 = pneg %p140
        %p377 = scmp.lt.s32.totalorder %s34, 2
        %s378 = scalar_select %p377, %s34, 2
        %s379 = scalar_lea.vmem %s4, %s378
        %p380 = pneg %p169
        %p381 = pneg %p166
        %p382 = pneg %p197
        %p383 = pneg %p194
        %s384 = sand.u32 %s184, 1
        %s385 = scalar_lea.sflag [#allocation4], %s384
        %s386 = sand.u32 %s184, 1
        %s387 = smul.addr %s386, 8
        %s388 = scalar_lea.vmem [#allocation8], %s387
        %p389 = pneg %p225
        %p390 = pneg %p222
        %s391 = sand.u32 %s212, 1
        %s392 = scalar_lea.sflag [#allocation10], %s391
        %s393 = sand.u32 %s212, 1
        %s394 = smul.addr %s393, 8
        %s395 = scalar_lea.vmem [#allocation9], %s394
        %p396 = scmp.lt.s32.totalorder %s34, 2
        %s397 = scalar_select %p396, %s34, 2
        %s398 = scalar_lea.vmem %s2, %s397
        %p399 = scmp.lt.s32.totalorder %s34, 2
        %s400 = scalar_select %p399, %s34, 2
        %s401 = scalar_lea.vmem %s4, %s400
        %v403 = vld [vmem:[%s328] sm:$0xf]
        %v404 = vld [vmem:[%s337] sm:$0xf]
        %v405 = vld [vmem:[%s337 + $0x4] sm:$0xf]
        %v406 = vld [vmem:[%s337 + $0x8] sm:$0xf]
        %v407 = vld [vmem:[%s337 + $0xc] sm:$0xf]
        %v408 = vld [vmem:[%s398] sm:$0x1]
        %v410 = vlaneseq
        %v411 = vshrl.u32 %v410, 7
        %v412 = vsub.s32 0, %v411
        %v413 = vrot.slane %v408, %v412
        %v419 = vunpack.c.l.b16 %v404
        %v420 = vunpack.c.l.b16 %v405
        %v421 = vunpack.c.l.b16 %v406
        %v422 = vunpack.c.l.b16 %v407
        %v423 = vpack.c.b16 %v420, %v419
        %v424 = vpack.c.b16 %v422, %v421
        %vm427 = vcmask 261120
        %v429 = vsel %vm427, %v403, 0
        %431 = vmatprep.subr.bf16.mxu0 0
        %432 = vmatpush1.bf16.msra.mxu0 0
        %433 = vmatprep.subr.bf16.mxu0 0
        %434 = vmatpush1.bf16.msra.mxu0 0
        %435 = vmatprep.subr.bf16.mxu0 0
        %436 = vmatpush1.bf16.msra.mxu0 0
        %437 = vmatprep.subr.bf16.mxu0 0
        %438 = vmatpush1.bf16.msra.mxu0 0
        %439 = vmatprep.subr.bf16.mxu0 0
        %440 = vmatpush1.bf16.msra.mxu0 0
        %441 = vmatprep.subr.bf16.mxu0 0
        %442 = vmatpush1.bf16.msra.mxu0 0
        %443 = vmatprep.subr.bf16.mxu0 0
        %444 = vmatpush1.bf16.msra.mxu0 %v424
        %445 = vmatprep.subr.bf16.mxu0 0
        %446 = vmatpush1.bf16.msra.mxu0 %v423
        %447 = vmatprep.subr.bf16.mxu0 0
        %448 = vmatpush2.bf16.msra.mxu0 0
        %449 = vmatprep.subr.bf16.mxu0 0
        %450 = vmatpush2.bf16.msra.mxu0 0
        %451 = vmatprep.subr.bf16.mxu0 0
        %452 = vmatpush2.bf16.msra.mxu0 0
        %453 = vmatprep.subr.bf16.mxu0 0
        %454 = vmatpush2.bf16.msra.mxu0 0
        %455 = vmatprep.subr.bf16.mxu0 0
        %456 = vmatpush2.bf16.msra.mxu0 0
        %457 = vmatprep.subr.bf16.mxu0 0
        %458 = vmatpush2.bf16.msra.mxu0 0
        %459 = vmatprep.subr.bf16.mxu0 0
        %460 = vmatpush2.bf16.msra.mxu0 0
        %461 = vmatprep.subr.bf16.mxu0 0
        %462 = vmatpush2.bf16.msra.mxu0 0
        %463 = vmatprep.mubr.bf16.mxu0 0
        %464 = vmatmul.mubr.bf16.gmra.mxu0 %v429
        %v465 = vpop.f32.mrf.mxu0
        %v466 = vadd.f32 %v413, %v465
        %v467 = vpop.f32.mrf.mxu0
        %v468 = vpop.f32.mrf.mxu0
        %v469 = vpop.f32.mrf.mxu0
        %470 = vdwg.mxu0
        %471 = vst [vmem:[%s395] sm:$0xff] %v466
        %v472 = vpack.c.bf16 %v466, %v466
        %v473 = vld [vmem:[%s346] sm:$0xf]
        %v474 = vld [vmem:[%s346 + $0x4] sm:$0xf]
        %v475 = vld [vmem:[%s346 + $0x8] sm:$0xf]
        %v476 = vld [vmem:[%s346 + $0xc] sm:$0xf]
        %v477 = vld [vmem:[%s346 + $0x10] sm:$0xf]
        %v478 = vld [vmem:[%s346 + $0x14] sm:$0xf]
        %v479 = vld [vmem:[%s346 + $0x18] sm:$0xf]
        %v480 = vld [vmem:[%s346 + $0x1c] sm:$0xf]
        %v481 = vld [vmem:[%s346 + $0x20] sm:$0xf]
        %v482 = vld [vmem:[%s346 + $0x24] sm:$0xf]
        %v483 = vld [vmem:[%s346 + $0x28] sm:$0xf]
        %v484 = vld [vmem:[%s346 + $0x2c] sm:$0xf]
        %v485 = vld [vmem:[%s346 + $0x30] sm:$0xf]
        %v486 = vld [vmem:[%s346 + $0x34] sm:$0xf]
        %v487 = vld [vmem:[%s346 + $0x38] sm:$0xf]
        %v488 = vld [vmem:[%s346 + $0x3c] sm:$0xf]
        %v489 = vld [vmem:[%s401] sm:$0x1]
        %v491 = vlaneseq
        %v492 = vshrl.u32 %v491, 7
        %v493 = vsub.s32 0, %v492
        %v494 = vrot.slane %v489, %v493
        %v512 = vunpack.c.l.b16 %v473
        %v513 = vunpack.c.l.b16 %v474
        %v514 = vunpack.c.l.b16 %v475
        %v515 = vunpack.c.l.b16 %v476
        %v516 = vunpack.c.l.b16 %v477
        %v517 = vunpack.c.l.b16 %v478
        %v518 = vunpack.c.l.b16 %v479
        %v519 = vunpack.c.l.b16 %v480
        %v520 = vunpack.c.l.b16 %v481
        %v521 = vunpack.c.l.b16 %v482
        %v522 = vunpack.c.l.b16 %v483
        %v523 = vunpack.c.l.b16 %v484
        %v524 = vunpack.c.l.b16 %v485
        %v525 = vunpack.c.l.b16 %v486
        %v526 = vunpack.c.l.b16 %v487
        %v527 = vunpack.c.l.b16 %v488
        %v528 = vpack.c.b16 %v513, %v512
        %v529 = vpack.c.b16 %v515, %v514
        %v530 = vpack.c.b16 %v517, %v516
        %v531 = vpack.c.b16 %v519, %v518
        %v532 = vpack.c.b16 %v521, %v520
        %v533 = vpack.c.b16 %v523, %v522
        %v534 = vpack.c.b16 %v525, %v524
        %v535 = vpack.c.b16 %v527, %v526
        %544 = vmatprep.subr.bf16.mxu0 0
        %545 = vmatpush1.bf16.msra.mxu0 %v535
        %546 = vmatprep.subr.bf16.mxu0 0
        %547 = vmatpush1.bf16.msra.mxu0 %v534
        %548 = vmatprep.subr.bf16.mxu0 0
        %549 = vmatpush1.bf16.msra.mxu0 %v533
        %550 = vmatprep.subr.bf16.mxu0 0
        %551 = vmatpush1.bf16.msra.mxu0 %v532
        %552 = vmatprep.subr.bf16.mxu0 0
        %553 = vmatpush1.bf16.msra.mxu0 %v531
        %554 = vmatprep.subr.bf16.mxu0 0
        %555 = vmatpush1.bf16.msra.mxu0 %v530
        %556 = vmatprep.subr.bf16.mxu0 0
        %557 = vmatpush1.bf16.msra.mxu0 %v529
        %558 = vmatprep.subr.bf16.mxu0 0
        %559 = vmatpush1.bf16.msra.mxu0 %v528
        %560 = vmatprep.subr.bf16.mxu0 0
        %561 = vmatpush2.bf16.msra.mxu0 0
        %562 = vmatprep.subr.bf16.mxu0 0
        %563 = vmatpush2.bf16.msra.mxu0 0
        %564 = vmatprep.subr.bf16.mxu0 0
        %565 = vmatpush2.bf16.msra.mxu0 0
        %566 = vmatprep.subr.bf16.mxu0 0
        %567 = vmatpush2.bf16.msra.mxu0 0
        %568 = vmatprep.subr.bf16.mxu0 0
        %569 = vmatpush2.bf16.msra.mxu0 0
        %570 = vmatprep.subr.bf16.mxu0 0
        %571 = vmatpush2.bf16.msra.mxu0 0
        %572 = vmatprep.subr.bf16.mxu0 0
        %573 = vmatpush2.bf16.msra.mxu0 0
        %574 = vmatprep.subr.bf16.mxu0 0
        %575 = vmatpush2.bf16.msra.mxu0 0
        %576 = vmatprep.mubr.bf16.mxu0 0
        %577 = vmatmul.mubr.bf16.gmra.mxu0 %v472
        %v578 = vpop.f32.mrf.mxu0
        %v579 = vadd.f32 %v494, %v578
        %v580 = vpop.f32.mrf.mxu0
        %v581 = vpop.f32.mrf.mxu0
        %v582 = vpop.f32.mrf.mxu0
        %583 = vdwg.mxu0
        %584 = vst [vmem:[%s388] sm:$0xff] %v579
        %s585 = sand.u32 %s184, 1
        %s586 = scalar_lea.sflag [#allocation4], %s585
        %s587 = sand.u32 %s184, 1
        %s588 = smul.addr %s587, 8
        %s589 = scalar_lea.vmem [#allocation8], %s588
        %s590 = sand.u32 %s212, 1
        %s591 = scalar_lea.sflag [#allocation10], %s590
        %s592 = sand.u32 %s212, 1
        %s593 = smul.addr %s592, 8
        %s594 = scalar_lea.vmem [#allocation9], %s593
        // Predicated region
        $region53: #{tpu_custom_call.1} parent=39 // pred_check
          %p595 = pneg %p194
        $region54: #{tpu_custom_call.1} parent=39 // pred_check_branch
          %597 = sbr.rel (%p595) target = $region56
        $region55: #{tpu_custom_call.1} parent=39 // pred_region
          %s599 = ssub.s32 128, 128
          %600 = vsyncadd %s586, %s599
          %s601 = sadd.s32 %s35, %s34
          %s602 = smul.addr %s601, 128
          %s603 = scalar_lea.hbm %s5, %s602
          %s605 = sshll.u32 %s589, 4
          %s606 = int_to_ptr.vmem [resolvable:$true] %s605
          %608 = dma.vmem_to_hbm [thread:$0]  %s606, 128, %s603, %s586
        $region56: #{tpu_custom_call.1} parent=39 // pred_fallthru
          _
        // Predicated region
        $region57: #{tpu_custom_call.1} parent=39 // pred_check
          %p609 = pneg %p222
        $region58: #{tpu_custom_call.1} parent=39 // pred_check_branch
          %611 = sbr.rel (%p609) target = $region60
        $region59: #{tpu_custom_call.1} parent=39 // pred_region
          %s613 = ssub.s32 128, 128
          %614 = vsyncadd %s591, %s613
          %s615 = sadd.s32 %s35, %s34
          %s616 = smul.addr %s615, 128
          %s617 = scalar_lea.hbm %s6, %s616
          %s619 = sshll.u32 %s594, 4
          %s620 = int_to_ptr.vmem [resolvable:$true] %s619
          %622 = dma.vmem_to_hbm [thread:$0]  %s620, 128, %s617, %s591
        $region60: #{tpu_custom_call.1} parent=39 // pred_fallthru
          _
      $region40: #{tpu_custom_call.1} parent=5 // pred_fallthru
        _
      %p623 = scmp.le.s32.totalorder 2, %s25
      // Predicated region
      $region61: #{tpu_custom_call.1} parent=5 // pred_check
        %p624 = pneg %p623
      $region62: #{tpu_custom_call.1} parent=5 // pred_check_branch
        %626 = sbr.rel (%p624) target = $region64
      $region63: #{tpu_custom_call.1} parent=5 // pred_region
        %s627 = ssub.s32 %s25, 2
        // Predicated region
        $region65: #{tpu_custom_call.1} parent=63 // pred_check
          %p628 = pneg %p200
        $region66: #{tpu_custom_call.1} parent=63 // pred_check_branch
          %630 = sbr.rel (%p628) target = $region68
        $region67: #{tpu_custom_call.1} parent=63 // pred_region
          %s631 = sand.u32 %s185, 1
          %s632 = scalar_lea.sflag [#allocation4], %s631
          %s633 = sand.u32 %s185, 1
          %s634 = smul.addr %s633, 8
          %s635 = scalar_lea.vmem [#allocation8], %s634
          %636 = dma.done %s632, 128
        $region68: #{tpu_custom_call.1} parent=63 // pred_fallthru
          _
        // Predicated region
        $region69: #{tpu_custom_call.1} parent=63 // pred_check
          %p637 = pneg %p228
        $region70: #{tpu_custom_call.1} parent=63 // pred_check_branch
          %639 = sbr.rel (%p637) target = $region72
        $region71: #{tpu_custom_call.1} parent=63 // pred_region
          %s640 = sand.u32 %s213, 1
          %s641 = scalar_lea.sflag [#allocation10], %s640
          %s642 = sand.u32 %s213, 1
          %s643 = smul.addr %s642, 8
          %s644 = scalar_lea.vmem [#allocation9], %s643
          %645 = dma.done %s641, 128
        $region72: #{tpu_custom_call.1} parent=63 // pred_fallthru
          _
      $region64: #{tpu_custom_call.1} parent=5 // pred_fallthru
        _
    $region6: #{tpu_custom_call.1} parent=1 // loop_footer
      %s29 = sadd.s32 1, %s25
    $region7: #{tpu_custom_call.1} parent=1 // loop_footer_branch
      %24 = sbr.rel target = $region3
    $region8: #{tpu_custom_call.1} parent=1 // loop_exit
      _
    %646 = vsyncpa [#allocation3], 1
    %s647 = scalar_lea.sflag [#allocation3], 1
    %648 = vsyncpa %s647, 1
    %649 = vsyncpa [#allocation6], 1
    %s650 = scalar_lea.sflag [#allocation6], 1
    %651 = vsyncpa %s650, 1
    %652 = vsyncpa [#allocation4], 1
    %s653 = scalar_lea.sflag [#allocation4], 1
    %654 = vsyncpa %s653, 1
    %655 = vsyncpa [#allocation10], 1
    %s656 = scalar_lea.sflag [#allocation10], 1
    %657 = vsyncpa %s656, 1

</llo_original>
